<compile_context>
chip_gen: v7x
topology: tpu7x:2x2x1
jax: 0.10.0
libtpu: 0.0.40
codegen_flags: <defaults>
</compile_context>

<pallas_src>
import jax
import jax.numpy as jnp
from jax import lax
from jax.experimental import pallas as pl
from jax.experimental.pallas import tpu as pltpu

NEG_SLOPE = 0.2
BN_EPS = 1e-5
_VMEM_LIMIT = 32 * 1024 * 1024


# ------------------------------ Pallas kernels ------------------------------

def _down_kernel(w_ref, p_ref, o_ref):
    # (ni, Cin*16) @ (Cin*16, tile) on the MXU, bf16 operands, f32 accumulation.
    # The up-branch ReLU (uprelu) and the bf16 cast of the intermediate are fused
    # into the epilogue (the raw down-conv output is consumed nowhere else).
    acc = jnp.dot(w_ref[...], p_ref[...], preferred_element_type=jnp.float32)
    o_ref[...] = jnp.maximum(acc, 0.0).astype(o_ref.dtype)


def _up_kernel(w_ref, p_ref, y_ref, s_ref):
    # (4*nf, ni*9) @ (ni*9, tile): all four ConvTranspose output phases in one
    # lane-dense matmul.  Per-(phase,channel) BatchNorm partials (sum, sumsq) are
    # fused so the up output never needs a separate reduction pass over HBM.
    y = jnp.dot(w_ref[...], p_ref[...], preferred_element_type=jnp.float32)
    y_ref[...] = y
    s_ref[...] = jnp.concatenate(
        [jnp.sum(y, axis=1, keepdims=True),
         jnp.sum(y * y, axis=1, keepdims=True)], axis=1)[None]


# ------------------------------ pallas_call wrappers -------------------------

def _row_tile(rows):
    for t in (2048, 1024, 512, 256, 128):
        if rows % t == 0:
            return t
    return rows  # fall back to a single full-extent block


def _mosaic_params():
    return pltpu.CompilerParams(
        dimension_semantics=("parallel",),      # shards row tiles across v7x's 2 TCs
        vmem_limit_bytes=_VMEM_LIMIT)


def _down_conv(wd, patches):
    cout, kdim = wd.shape
    rows = patches.shape[1]
    tile = _row_tile(rows)
    return pl.pallas_call(
        _down_kernel,
        out_shape=jax.ShapeDtypeStruct((cout, rows), jnp.bfloat16),
        grid=(rows // tile,),
        in_specs=[pl.BlockSpec((cout, kdim), lambda i: (0, 0)),   # weight: resident
                  pl.BlockSpec((kdim, tile), lambda i: (0, i))],
        out_specs=pl.BlockSpec((cout, tile), lambda i: (0, i)),
        compiler_params=_mosaic_params(),
    )(wd, patches)


def _up_conv(wu, patches):
    cout, kdim = wu.shape
    rows = patches.shape[1]
    tile = _row_tile(rows)
    nt = rows // tile
    return pl.pallas_call(
        _up_kernel,
        out_shape=(jax.ShapeDtypeStruct((cout, rows), jnp.float32),
                   jax.ShapeDtypeStruct((nt, cout, 2), jnp.float32)),
        grid=(nt,),
        in_specs=[pl.BlockSpec((cout, kdim), lambda i: (0, 0)),   # weight: resident
                  pl.BlockSpec((kdim, tile), lambda i: (0, i))],
        out_specs=(pl.BlockSpec((cout, tile), lambda i: (0, i)),
                   pl.BlockSpec((1, cout, 2), lambda i: (i, 0, 0))),
        compiler_params=_mosaic_params(),
    )(wu, patches)


# ------------------------------- glue (JAX/XLA) -------------------------------

def _im2col_cm(x_cm_pad, K, stride, OH, OW):
    """Channel-major padded (C, N, Hp, Wp) -> (C*K*K, N*OH*OW).
    Contraction ordering (c, kh, kw); row (lane) ordering (n, oh, ow)."""
    C = x_cm_pad.shape[0]
    N = x_cm_pad.shape[1]
    taps = []
    for kh in range(K):
        for kw in range(K):
            taps.append(x_cm_pad[:, :, kh:kh + stride * OH:stride,
                                       kw:kw + stride * OW:stride])
    p = jnp.stack(taps, axis=1)                    # (C, K*K, N, OH, OW)
    return p.reshape(C * K * K, N * OH * OW)


def _embed_upconv_weight(w_up, nf, ni):
    """Fold the 4 output phases of ConvTranspose2d(k4,s2,p1) into one (4*nf, ni*9)
    matrix acting on a 3x3/stride-1 im2col of the 1-padded down output.
    Phase (di,dj), tap (ah,aw) uses w_up[ci, co, 3-di-2ah, 3-dj-2aw] at super-kernel
    position (di+ah, dj+aw); the other 5 of 9 taps are zero."""
    w_emb = jnp.zeros((2, 2, nf, ni, 3, 3), jnp.float32)
    for di in range(2):
        for dj in range(2):
            for ah in range(2):
                for aw in range(2):
                    w_emb = w_emb.at[di, dj, :, :, di + ah, dj + aw].set(
                        w_up[:, :, 3 - di - 2 * ah, 3 - dj - 2 * aw].T)
    return w_emb.reshape(4 * nf, ni * 9)


def unet_block_innermost_forward(x, w_down, w_up, gamma, beta):
    """x: (N, nf, H, W) NCHW.  Returns (N, 2*nf, H, W)."""
    N, Cin, H, W = x.shape
    ni = w_down.shape[0]              # Conv2d weight: (ni, Cin, 4, 4)
    nf = w_up.shape[1]                # ConvTranspose2d weight: (ni, nf, 4, 4)
    OH, OW = H // 2, W // 2

    # Skip branch: the inplace LeakyReLU mutates x before torch.cat reads it.
    h = jnp.where(x >= 0, x, NEG_SLOPE * x)

    # ---- down: Conv2d(Cin -> ni, k4 s2 p1) applied to leaky(x), channel-major.
    h_cm = jnp.pad(h.transpose(1, 0, 2, 3), ((0, 0), (0, 0), (1, 1), (1, 1)))
    patches_d = _im2col_cm(h_cm, 4, 2, OH, OW).astype(jnp.bfloat16)   # (Cin*16, rows)
    wd = w_down.reshape(ni, Cin * 16).astype(jnp.bfloat16)            # (ni, Cin*16)
    d = _down_conv(wd, patches_d)           # (ni, N*OH*OW) bf16, already ReLU'd

    # ---- up: ConvTranspose2d(ni -> nf, k4 s2 p1), phase-decomposed (no dilation).
    d_cm = jnp.pad(d.reshape(ni, N, OH, OW), ((0, 0), (0, 0), (1, 1), (1, 1)))
    patches_u = _im2col_cm(d_cm, 3, 1, OH, OW)                        # (ni*9, rows) bf16
    wu = _embed_upconv_weight(w_up, nf, ni).astype(jnp.bfloat16)      # (4*nf, ni*9)
    y, stats = _up_conv(wu, patches_u)      # y: (4*nf, N*OH*OW) f32; stats partials

    # ---- BatchNorm2d(nf), training-mode batch statistics (biased variance).
    # Reduce the fused per-tile partials over tiles and over the 4 phases.
    s = jnp.sum(stats, axis=0).reshape(4, nf, 2).sum(axis=0)          # (nf, 2)
    count = float(N * H * W)
    mean = s[:, 0] / count
    var = s[:, 1] / count - mean * mean
    scale = gamma * lax.rsqrt(var + BN_EPS)
    shift = beta - mean * scale

    y6 = y.reshape(2, 2, nf, N, OH, OW)           # [di, dj, co, n, i, j]
    y6 = y6 * scale.reshape(1, 1, nf, 1, 1, 1) + shift.reshape(1, 1, nf, 1, 1, 1)
    # Phase interleave: out[n, co, 2i+di, 2j+dj] = y6[di, dj, co, n, i, j].
    up = jnp.transpose(y6, (3, 2, 4, 0, 5, 1)).reshape(N, nf, H, W)

    # TODO(synk): the phase interleave + concat (and writing the skip half directly
    # into its output slice via input_output_aliases) could become a final Pallas
    # pass; left to XLA since these tensors are much smaller than the patch matrices.
    return jnp.concatenate([h, up], axis=1)


# ----------------------------- pure-JAX reference ----------------------------

def _reference(x, w_down, w_up, gamma, beta):
    # Reference with matched numerics: bf16 conv operands, f32 accumulation.
    h = jnp.where(x >= 0, x, NEG_SLOPE * x)
    d = lax.conv_general_dilated(
        h.astype(jnp.bfloat16), w_down.astype(jnp.bfloat16),
        window_strides=(2, 2), padding=((1, 1), (1, 1)),
        dimension_numbers=("NCHW", "OIHW", "NCHW"),
        preferred_element_type=jnp.float32)
    d = jnp.maximum(d, 0.0).astype(jnp.bfloat16)
    w_eq = jnp.flip(w_up, axis=(2, 3)).transpose(1, 0, 2, 3).astype(jnp.bfloat16)
    u = lax.conv_general_dilated(
        d, w_eq, window_strides=(1, 1), padding=((2, 2), (2, 2)),
        lhs_dilation=(2, 2), dimension_numbers=("NCHW", "OIHW", "NCHW"),
        preferred_element_type=jnp.float32)
    mean = u.mean(axis=(0, 2, 3), keepdims=True)
    var = ((u - mean) ** 2).mean(axis=(0, 2, 3), keepdims=True)
    u = (u - mean) * lax.rsqrt(var + BN_EPS)
    u = u * gamma.reshape(1, -1, 1, 1) + beta.reshape(1, -1, 1, 1)
    return jnp.concatenate([h, u], axis=1)


# ----------------------------------- main ------------------------------------

if __name__ == "__main__":
    key = jax.random.PRNGKey(0)
    N, nf, ni, H, W = 2, 4, 8, 16, 16            # small shapes consistent with the module
    k1, k2, k3 = jax.random.split(key, 3)

    x = jax.random.normal(k1, (N, nf, H, W), jnp.float32)
    # deterministic synthetic parameters (shapes from __init__; no checkpoint load)
    w_down = jax.random.normal(k2, (ni, nf, 4, 4), jnp.float32) * 0.1   # Conv2d
    w_up = jax.random.normal(k3, (ni, nf, 4, 4), jnp.float32) * 0.1     # ConvTranspose2d
    gamma = jnp.ones((nf,), jnp.float32)                                # BatchNorm2d weight
    beta = jnp.zeros((nf,), jnp.float32)                                # BatchNorm2d bias

    out = jax.jit(unet_block_innermost_forward)(x, w_down, w_up, gamma, beta)
    out = jax.block_until_ready(out)
    assert out.shape == (N, 2 * nf, H, W), out.shape

    ref = _reference(x, w_down, w_up, gamma, beta)
    err = float(jnp.max(jnp.abs(out - ref)))
    assert jnp.allclose(out, ref, atol=1e-2, rtol=1e-2), err

    print("KERNEL_OK")
</pallas_src>

<mosaic_0001>
module attributes {stable_mosaic.version = 11 : i64} {
  func.func @_down_kernel(%arg0: i32, %arg1: memref<8x64xbf16, #tpu.memory_space<vmem>>, %arg2: memref<64x128xbf16, #tpu.memory_space<vmem>>, %arg3: memref<8x128xbf16, #tpu.memory_space<vmem>>) attributes {dimension_semantics = [#tpu.dimension_semantics<parallel>], iteration_bounds = array<i64: 1>, scalar_prefetch = 0 : i64, scratch_operands = 0 : i64, tpu.core_type = #tpu.core_type<tc>, window_params = [{pipeline_mode = #tpu.pipeline_mode<synchronous>, transform_indices = @transform_0, window_bounds = array<i64: 8, 64>}, {transform_indices = @transform_1, window_bounds = array<i64: 64, 128>}, {transform_indices = @transform_2, window_bounds = array<i64: 8, 128>}]} {
    %c0 = arith.constant 0 : index
    %c0_0 = arith.constant 0 : index
    %0 = vector.load %arg1[%c0, %c0_0] : memref<8x64xbf16, #tpu.memory_space<vmem>>, vector<8x64xbf16>
    %c0_1 = arith.constant 0 : index
    %c0_2 = arith.constant 0 : index
    %1 = vector.load %arg2[%c0_1, %c0_2] : memref<64x128xbf16, #tpu.memory_space<vmem>>, vector<64x128xbf16>
    %cst = arith.constant dense<0.000000e+00> : vector<8x128xf32>
    %2 = tpu.matmul %0, %1, %cst {dimension_numbers = #tpu.dot_dimension_numbers<[1], [0], [0], [1], [0, 0, 1, 1], [], []>} : vector<8x64xbf16>, vector<64x128xbf16>, vector<8x128xf32> -> vector<8x128xf32>
    %cst_3 = arith.constant 0.000000e+00 : f32
    %3 = vector.broadcast %cst_3 : f32 to vector<8x128xf32>
    %4 = arith.maximumf %2, %3 : vector<8x128xf32>
    %5 = arith.truncf %4 : vector<8x128xf32> to vector<8x128xbf16>
    %c0_4 = arith.constant 0 : index
    %c0_5 = arith.constant 0 : index
    %6 = vector.load %arg3[%c0_4, %c0_5] : memref<8x128xbf16, #tpu.memory_space<vmem>>, vector<8x128xbf16>
    tpu.vector_store %arg3[%c0_4, %c0_5], %5 {strides = array<i32>} : memref<8x128xbf16, #tpu.memory_space<vmem>>, vector<8x128xbf16>,
    return
  }
  func.func @transform_0(%arg0: i32) -> (i32, i32) {
    %c0_i32 = arith.constant 0 : i32
    %c0_i32_0 = arith.constant 0 : i32
    %c0_i32_1 = arith.constant 0 : i32
    return %c0_i32, %c0_i32_0 : i32, i32
  }
  func.func @transform_1(%arg0: i32) -> (i32, i32) {
    %c0_i32 = arith.constant 0 : i32
    %c0_i32_0 = arith.constant 0 : i32
    return %c0_i32, %arg0 : i32, i32
  }
  func.func @transform_2(%arg0: i32) -> (i32, i32) {
    %c0_i32 = arith.constant 0 : i32
    %c0_i32_0 = arith.constant 0 : i32
    return %c0_i32, %arg0 : i32, i32
  }
}

module attributes {stable_mosaic.version = 11 : i64} {
  func.func @_up_kernel(%arg0: i32, %arg1: memref<16x72xbf16, #tpu.memory_space<vmem>>, %arg2: memref<72x128xbf16, #tpu.memory_space<vmem>>, %arg3: memref<16x128xf32, #tpu.memory_space<vmem>>, %arg4: memref<1x16x2xf32, #tpu.memory_space<vmem>>) attributes {dimension_semantics = [#tpu.dimension_semantics<parallel>], iteration_bounds = array<i64: 1>, scalar_prefetch = 0 : i64, scratch_operands = 0 : i64, tpu.core_type = #tpu.core_type<tc>, window_params = [{pipeline_mode = #tpu.pipeline_mode<synchronous>, transform_indices = @transform_0, window_bounds = array<i64: 16, 72>}, {transform_indices = @transform_1, window_bounds = array<i64: 72, 128>}, {transform_indices = @transform_2, window_bounds = array<i64: 16, 128>}, {transform_indices = @transform_3, window_bounds = array<i64: 1, 16, 2>}]} {
    %c0 = arith.constant 0 : index
    %c0_0 = arith.constant 0 : index
    %0 = vector.load %arg1[%c0, %c0_0] : memref<16x72xbf16, #tpu.memory_space<vmem>>, vector<16x72xbf16>
    %c0_1 = arith.constant 0 : index
    %c0_2 = arith.constant 0 : index
    %1 = vector.load %arg2[%c0_1, %c0_2] : memref<72x128xbf16, #tpu.memory_space<vmem>>, vector<72x128xbf16>
    %cst = arith.constant dense<0.000000e+00> : vector<16x128xf32>
    %2 = tpu.matmul %0, %1, %cst {dimension_numbers = #tpu.dot_dimension_numbers<[1], [0], [0], [1], [0, 0, 1, 1], [], []>} : vector<16x72xbf16>, vector<72x128xbf16>, vector<16x128xf32> -> vector<16x128xf32>
    %c0_3 = arith.constant 0 : index
    %c0_4 = arith.constant 0 : index
    %3 = vector.load %arg3[%c0_3, %c0_4] : memref<16x128xf32, #tpu.memory_space<vmem>>, vector<16x128xf32>
    tpu.vector_store %arg3[%c0_3, %c0_4], %2 {strides = array<i32>} : memref<16x128xf32, #tpu.memory_space<vmem>>, vector<16x128xf32>,
    %cst_5 = arith.constant dense<0.000000e+00> : vector<16xf32>
    %4 = vector.multi_reduction <add>, %2, %cst_5 [1] : vector<16x128xf32> to vector<16xf32>
    %5 = vector.shape_cast %4 : vector<16xf32> to vector<16x1xf32>
    %6 = arith.mulf %2, %2 : vector<16x128xf32>
    %cst_6 = arith.constant dense<0.000000e+00> : vector<16xf32>
    %7 = vector.multi_reduction <add>, %6, %cst_6 [1] : vector<16x128xf32> to vector<16xf32>
    %8 = vector.shape_cast %7 : vector<16xf32> to vector<16x1xf32>
    %9 = tpu.concatenate %5, %8 in 1 : vector<16x1xf32>, vector<16x1xf32> -> vector<16x2xf32>
    %10 = vector.shape_cast %9 : vector<16x2xf32> to vector<1x16x2xf32>
    %c0_7 = arith.constant 0 : index
    %c0_8 = arith.constant 0 : index
    %c0_9 = arith.constant 0 : index
    %11 = vector.load %arg4[%c0_7, %c0_8, %c0_9] : memref<1x16x2xf32, #tpu.memory_space<vmem>>, vector<1x16x2xf32>
    tpu.vector_store %arg4[%c0_7, %c0_8, %c0_9], %10 {strides = array<i32>} : memref<1x16x2xf32, #tpu.memory_space<vmem>>, vector<1x16x2xf32>,
    return
  }
  func.func @transform_0(%arg0: i32) -> (i32, i32) {
    %c0_i32 = arith.constant 0 : i32
    %c0_i32_0 = arith.constant 0 : i32
    %c0_i32_1 = arith.constant 0 : i32
    return %c0_i32, %c0_i32_0 : i32, i32
  }
  func.func @transform_1(%arg0: i32) -> (i32, i32) {
    %c0_i32 = arith.constant 0 : i32
    %c0_i32_0 = arith.constant 0 : i32
    return %c0_i32, %arg0 : i32, i32
  }
  func.func @transform_2(%arg0: i32) -> (i32, i32) {
    %c0_i32 = arith.constant 0 : i32
    %c0_i32_0 = arith.constant 0 : i32
    return %c0_i32, %arg0 : i32, i32
  }
  func.func @transform_3(%arg0: i32) -> (i32, i32, i32) {
    %c0_i32 = arith.constant 0 : i32
    %c0_i32_0 = arith.constant 0 : i32
    %c0_i32_1 = arith.constant 0 : i32
    return %arg0, %c0_i32, %c0_i32_0 : i32, i32, i32
  }
}

</mosaic_0001>

<llo_original>
// kernel: unet_block_innermost_forward.2
$region0: #{unet_block_innermost_forward.2}
  #allocation0 [shape = 'u32[]', space=smem, size = 0x4, offset = 0x4, fixed_abs, tag = 'smem constant byte address 0x4 - core index']
  #allocation1 [shape = 'u32[144,128]{1,0:T(1,128)}', space=vmem, size = 0x12000, scoped, tag = 'internal scratch']
  %s0 = inlined_call_operand.vmem [shape: bf16[8,64], index: 0, kind: input, shape index: {}]
  %s1 = inlined_call_operand.vmem [shape: bf16[64,128], index: 1, kind: input, shape index: {}]
  %s2 = inlined_call_operand.vmem [shape: bf16[8,128], index: 2, kind: output, shape index: {}]
  %s3 = sld [smem:[#allocation0]]
  $region18: #{unet_block_innermost_forward.2} parent=0
    _
  %s5 = ssub.s32 1, %s3
  %s6 = scalar_select 0, %s5, %s3
  // Predicated region
  $region2: #{unet_block_innermost_forward.2} parent=0 // pred_check
    _
  $region3: #{unet_block_innermost_forward.2} parent=0 // pred_check_branch
    %8 = sbr.rel (0) target = $region5
  $region4: #{unet_block_innermost_forward.2} parent=0 // pred_region
    _
  $region5: #{unet_block_innermost_forward.2} parent=0 // pred_fallthru
    _
  // Predicated region
  $region6: #{unet_block_innermost_forward.2} parent=0 // pred_check
    _
  $region7: #{unet_block_innermost_forward.2} parent=0 // pred_check_branch
    %10 = sbr.rel (0) target = $region9
  $region8: #{unet_block_innermost_forward.2} parent=0 // pred_region
    _
  $region9: #{unet_block_innermost_forward.2} parent=0 // pred_fallthru
    _
  %v12 = vld [vmem:[%s0] sm:$0xf]
  %v13 = vld [vmem:[%s1] sm:$0xf]
  %v14 = vld [vmem:[%s1 + $0x4] sm:$0xf]
  %v15 = vld [vmem:[%s1 + $0x8] sm:$0xf]
  %v16 = vld [vmem:[%s1 + $0xc] sm:$0xf]
  %v17 = vld [vmem:[%s1 + $0x10] sm:$0xf]
  %v18 = vld [vmem:[%s1 + $0x14] sm:$0xf]
  %v19 = vld [vmem:[%s1 + $0x18] sm:$0xf]
  %v20 = vld [vmem:[%s1 + $0x1c] sm:$0xf]
  %v29 = vunpack.c.l.b16 %v13
  %v30 = vunpack.c.l.b16 %v14
  %v31 = vunpack.c.l.b16 %v15
  %v32 = vunpack.c.l.b16 %v16
  %v33 = vunpack.c.l.b16 %v17
  %v34 = vunpack.c.l.b16 %v18
  %v35 = vunpack.c.l.b16 %v19
  %v36 = vunpack.c.l.b16 %v20
  %v37 = vpack.c.b16 %v30, %v29
  %v38 = vpack.c.b16 %v32, %v31
  %v39 = vpack.c.b16 %v34, %v33
  %v40 = vpack.c.b16 %v36, %v35
  %vm45 = vcmask 523264
  %v47 = vsel %vm45, %v12, 0
  %49 = vmatprep.subr.bf16.mxu0 0
  %50 = vmatpush1.bf16.msra.mxu0 %v37
  %51 = vmatprep.subr.bf16.mxu0 0
  %52 = vmatpush1.bf16.msra.mxu0 %v38
  %53 = vmatprep.subr.bf16.mxu0 0
  %54 = vmatpush1.bf16.msra.mxu0 %v39
  %55 = vmatprep.subr.bf16.mxu0 0
  %56 = vmatpush1.bf16.msra.mxu0 %v40
  %57 = vmatprep.subr.bf16.mxu0 0
  %58 = vmatpush1.bf16.msra.mxu0 0
  %59 = vmatprep.subr.bf16.mxu0 0
  %60 = vmatpush1.bf16.msra.mxu0 0
  %61 = vmatprep.subr.bf16.mxu0 0
  %62 = vmatpush1.bf16.msra.mxu0 0
  %63 = vmatprep.subr.bf16.mxu0 0
  %64 = vmatpush1.bf16.msra.mxu0 0
  %65 = vmatprep.subr.bf16.mxu0 0
  %66 = vmatpush1.bf16.msra.mxu0 0
  %67 = vmatprep.subr.bf16.mxu0 0
  %68 = vmatpush1.bf16.msra.mxu0 0
  %69 = vmatprep.subr.bf16.mxu0 0
  %70 = vmatpush1.bf16.msra.mxu0 0
  %71 = vmatprep.subr.bf16.mxu0 0
  %72 = vmatpush1.bf16.msra.mxu0 0
  %73 = vmatprep.subr.bf16.mxu0 0
  %74 = vmatpush1.bf16.msra.mxu0 0
  %75 = vmatprep.subr.bf16.mxu0 0
  %76 = vmatpush1.bf16.msra.mxu0 0
  %77 = vmatprep.subr.bf16.mxu0 0
  %78 = vmatpush1.bf16.msra.mxu0 0
  %79 = vmatprep.subr.bf16.mxu0 0
  %80 = vmatpush1.bf16.msra.mxu0 0
  %81 = vmatprep.mubr.bf16.mxu0 0
  %82 = vmatmul.mubr.bf16.gmra.mrb[0].mxu0 %v47
  %v83 = vpop.f32.mrb[0].mxu0
  %v84 = vadd.f32 0.0, %v83
  %v85 = vpop.f32.mrb[0].mxu0
  %v86 = vpop.f32.mrb[0].mxu0
  %v87 = vpop.f32.mrb[0].mxu0
  %88 = vdwg.mxu0
  %v89 = vmax.f32 %v84, 0.0
  %v90 = vpack.c.bf16 %v89, %v89
  %91 = vst [vmem:[%s2] sm:$0xf] %v90
  // Predicated region
  $region10: #{unet_block_innermost_forward.2} parent=0 // pred_check
    _
  $region11: #{unet_block_innermost_forward.2} parent=0 // pred_check_branch
    %93 = sbr.rel (0) target = $region13
  $region12: #{unet_block_innermost_forward.2} parent=0 // pred_region
    _
  $region13: #{unet_block_innermost_forward.2} parent=0 // pred_fallthru
    _
  // Predicated region
  $region14: #{unet_block_innermost_forward.2} parent=0 // pred_check
    _
  $region15: #{unet_block_innermost_forward.2} parent=0 // pred_check_branch
    %95 = sbr.rel (0) target = $region17
  $region16: #{unet_block_innermost_forward.2} parent=0 // pred_region
    _
  $region17: #{unet_block_innermost_forward.2} parent=0 // pred_fallthru
    _

// kernel: unet_block_innermost_forward.3
$region0: #{unet_block_innermost_forward.3}
  #allocation0 [shape = 'u32[]', space=smem, size = 0x4, offset = 0x4, fixed_abs, tag = 'smem constant byte address 0x4 - core index']
  #allocation1 [shape = 'u32[144,128]{1,0:T(1,128)}', space=vmem, size = 0x12000, scoped, tag = 'internal scratch']
  %s0 = inlined_call_operand.vmem [shape: bf16[16,72], index: 0, kind: input, shape index: {}]
  %s1 = inlined_call_operand.vmem [shape: bf16[72,128], index: 1, kind: input, shape index: {}]
  %s2 = inlined_call_operand.vmem [shape: f32[16,128], index: 2, kind: output, shape index: {0}]
  %s3 = inlined_call_operand.vmem [shape: f32[1,16,2], index: 3, kind: output, shape index: {1}]
  %4 = xla_tuple %s2, %s3
  %s5 = sld [smem:[#allocation0]]
  $region26: #{unet_block_innermost_forward.3} parent=0
    _
  %s7 = ssub.s32 1, %s5
  %s8 = scalar_select 0, %s7, %s5
  // Predicated region
  $region2: #{unet_block_innermost_forward.3} parent=0 // pred_check
    _
  $region3: #{unet_block_innermost_forward.3} parent=0 // pred_check_branch
    %10 = sbr.rel (0) target = $region5
  $region4: #{unet_block_innermost_forward.3} parent=0 // pred_region
    _
  $region5: #{unet_block_innermost_forward.3} parent=0 // pred_fallthru
    _
  // Predicated region
  $region6: #{unet_block_innermost_forward.3} parent=0 // pred_check
    _
  $region7: #{unet_block_innermost_forward.3} parent=0 // pred_check_branch
    %12 = sbr.rel (0) target = $region9
  $region8: #{unet_block_innermost_forward.3} parent=0 // pred_region
    _
  $region9: #{unet_block_innermost_forward.3} parent=0 // pred_fallthru
    _
  %v14 = vld [vmem:[%s0] sm:$0xf]
  %v15 = vld [vmem:[%s0 + $0x4] sm:$0xf]
  %v16 = vld [vmem:[%s1] sm:$0xf]
  %v17 = vld [vmem:[%s1 + $0x4] sm:$0xf]
  %v18 = vld [vmem:[%s1 + $0x8] sm:$0xf]
  %v19 = vld [vmem:[%s1 + $0xc] sm:$0xf]
  %v20 = vld [vmem:[%s1 + $0x10] sm:$0xf]
  %v21 = vld [vmem:[%s1 + $0x14] sm:$0xf]
  %v22 = vld [vmem:[%s1 + $0x18] sm:$0xf]
  %v23 = vld [vmem:[%s1 + $0x1c] sm:$0xf]
  %v24 = vld [vmem:[%s1 + $0x20] sm:$0xf]
  %v27 = vunpack.c.l.b16 %v14
  %v28 = vunpack.c.l.b16 %v15
  %v29 = vpack.c.b16 %v28, %v27
  %v39 = vunpack.c.l.b16 %v16
  %v40 = vunpack.c.l.b16 %v17
  %v41 = vunpack.c.l.b16 %v18
  %v42 = vunpack.c.l.b16 %v19
  %v43 = vunpack.c.l.b16 %v20
  %v44 = vunpack.c.l.b16 %v21
  %v45 = vunpack.c.l.b16 %v22
  %v46 = vunpack.c.l.b16 %v23
  %v47 = vunpack.c.l.b16 %v24
  %v48 = vpack.c.b16 %v40, %v39
  %v49 = vpack.c.b16 %v42, %v41
  %v50 = vpack.c.b16 %v44, %v43
  %v51 = vpack.c.b16 %v46, %v45
  %v52 = vpack.c.b16 %v47, %v47
  %vm57 = vcmask 588800
  %v59 = vsel %vm57, %v29, 0
  %vm61 = vcmask 1043456
  %v63 = vsel %vm61, %v52, 0
  %65 = vmatprep.subr.bf16.mxu0 0
  %66 = vmatpush1.bf16.msra.mxu0 %v48
  %67 = vmatprep.subr.bf16.mxu0 0
  %68 = vmatpush1.bf16.msra.mxu0 %v49
  %69 = vmatprep.subr.bf16.mxu0 0
  %70 = vmatpush1.bf16.msra.mxu0 %v50
  %71 = vmatprep.subr.bf16.mxu0 0
  %72 = vmatpush1.bf16.msra.mxu0 %v51
  %73 = vmatprep.subr.bf16.mxu0 0
  %74 = vmatpush1.bf16.msra.mxu0 %v63
  %75 = vmatprep.subr.bf16.mxu0 0
  %76 = vmatpush1.bf16.msra.mxu0 0
  %77 = vmatprep.subr.bf16.mxu0 0
  %78 = vmatpush1.bf16.msra.mxu0 0
  %79 = vmatprep.subr.bf16.mxu0 0
  %80 = vmatpush1.bf16.msra.mxu0 0
  %81 = vmatprep.subr.bf16.mxu0 0
  %82 = vmatpush1.bf16.msra.mxu0 0
  %83 = vmatprep.subr.bf16.mxu0 0
  %84 = vmatpush1.bf16.msra.mxu0 0
  %85 = vmatprep.subr.bf16.mxu0 0
  %86 = vmatpush1.bf16.msra.mxu0 0
  %87 = vmatprep.subr.bf16.mxu0 0
  %88 = vmatpush1.bf16.msra.mxu0 0
  %89 = vmatprep.subr.bf16.mxu0 0
  %90 = vmatpush1.bf16.msra.mxu0 0
  %91 = vmatprep.subr.bf16.mxu0 0
  %92 = vmatpush1.bf16.msra.mxu0 0
  %93 = vmatprep.subr.bf16.mxu0 0
  %94 = vmatpush1.bf16.msra.mxu0 0
  %95 = vmatprep.subr.bf16.mxu0 0
  %96 = vmatpush1.bf16.msra.mxu0 0
  %97 = vmatprep.mubr.bf16.mxu0 0
  %98 = vmatmul.mubr.bf16.gmra.mrb[0].mxu0 %v59
  %v99 = vpop.f32.mrb[0].mxu0
  %v100 = vadd.f32 0.0, %v99
  %v101 = vpop.f32.mrb[0].mxu0
  %v102 = vpop.f32.mrb[0].mxu0
  %v103 = vadd.f32 0.0, %v102
  %v104 = vpop.f32.mrb[0].mxu0
  %105 = vdwg.mxu0
  %106 = vst [vmem:[%s2] sm:$0xff] %v100
  %107 = vst [vmem:[%s2 + $0x8] sm:$0xff] %v103
  %108 = vadd.xlane.f32.xlu0 %v100
  %v109 = vpop.xlane.xlu0 %108
  %110 = vadd.xlane.f32.xlu0 %v103
  %v111 = vpop.xlane.xlu0 %110
  %v112 = vmul.f32 %v100, %v100
  %v113 = vmul.f32 %v103, %v103
  %114 = vadd.xlane.f32.xlu0 %v112
  %v115 = vpop.xlane.xlu0 %114
  %116 = vadd.xlane.f32.xlu0 %v113
  %v117 = vpop.xlane.xlu0 %116
  %vm118 = vcmask 7168
  %v119 = vsel %vm118, %v109, %v115
  %v120 = vsel %vm118, %v111, %v117
  %vm121 = vcmask 15360
  %122 = vst.msk [vmem:[%s3] sm:$0xff] %vm121, %v119
  %123 = vst.msk [vmem:[%s3 + $0x8] sm:$0xff] %vm121, %v120
  // Predicated region
  $region10: #{unet_block_innermost_forward.3} parent=0 // pred_check
    _
  $region11: #{unet_block_innermost_forward.3} parent=0 // pred_check_branch
    %125 = sbr.rel (0) target = $region13
  $region12: #{unet_block_innermost_forward.3} parent=0 // pred_region
    _
  $region13: #{unet_block_innermost_forward.3} parent=0 // pred_fallthru
    _
  // Predicated region
  $region14: #{unet_block_innermost_forward.3} parent=0 // pred_check
    _
  $region15: #{unet_block_innermost_forward.3} parent=0 // pred_check_branch
    %127 = sbr.rel (0) target = $region17
  $region16: #{unet_block_innermost_forward.3} parent=0 // pred_region
    _
  $region17: #{unet_block_innermost_forward.3} parent=0 // pred_fallthru
    _
  // Predicated region
  $region18: #{unet_block_innermost_forward.3} parent=0 // pred_check
    _
  $region19: #{unet_block_innermost_forward.3} parent=0 // pred_check_branch
    %129 = sbr.rel (0) target = $region21
  $region20: #{unet_block_innermost_forward.3} parent=0 // pred_region
    _
  $region21: #{unet_block_innermost_forward.3} parent=0 // pred_fallthru
    _
  // Predicated region
  $region22: #{unet_block_innermost_forward.3} parent=0 // pred_check
    _
  $region23: #{unet_block_innermost_forward.3} parent=0 // pred_check_branch
    %131 = sbr.rel (0) target = $region25
  $region24: #{unet_block_innermost_forward.3} parent=0 // pred_region
    _
  $region25: #{unet_block_innermost_forward.3} parent=0 // pred_fallthru
    _

</llo_original>
